<compile_context>
chip_gen: v6e
topology: v6e:2x2x1
jax: 0.10.0
libtpu: 0.0.40
codegen_flags: <defaults>
</compile_context>

<pallas_src>
import math
import functools

import jax
import jax.numpy as jnp
from jax.experimental import pallas as pl
from jax.experimental.pallas import tpu as pltpu

_NEG_BIG = -1e30  # "minus infinity" stand-in that stays finite under *scale


def _sphere_loss_kernel(y_hat_ref, label_ref, partial_ref,
                        c_acc, m_run, s_run,
                        *, m, scale, batch, num_class, tile_rows, tile_cols):
    """One (row-tile, col-tile) step of the fused SphereFace cross-entropy.

    Online softmax over the class axis; the label column is gathered into c_acc and
    kept OUT of the running sum.  At the last column tile the theta->psi margin
    transform (Chebyshev T_m + k-counting, no acos) is applied and the label term
    exp(scale*(psi - max)) is folded back in.
    """
    i = pl.program_id(0)
    j = pl.program_id(1)
    nj = pl.num_programs(1)

    @pl.when(j == 0)
    def _init():
        c_acc[...] = jnp.zeros(c_acc.shape, jnp.float32)
        m_run[...] = jnp.full(m_run.shape, _NEG_BIG, jnp.float32)
        s_run[...] = jnp.zeros(s_run.shape, jnp.float32)

    x = y_hat_ref[...].astype(jnp.float32)                        # (TB, TC)
    label = label_ref[...]                                        # (TB, 1) int32
    col = jax.lax.broadcasted_iota(jnp.int32, x.shape, 1) + j * tile_cols

    # Gather cos(theta_y): padding columns have col >= num_class > label, never match.
    is_label = col == label
    c_acc[...] += jnp.sum(jnp.where(is_label, x, 0.0), axis=1, keepdims=True)

    # Online max / sum over the NON-label (and non-padding) columns only.
    has_pad = (num_class % tile_cols) != 0
    drop = (is_label | (col >= num_class)) if has_pad else is_label
    x_m = jnp.where(drop, _NEG_BIG, x)
    tile_max = jnp.max(x_m, axis=1, keepdims=True)                # (TB, 1)
    m_prev = m_run[...]
    m_new = jnp.maximum(m_prev, tile_max)
    s_run[...] = (s_run[...] * jnp.exp(scale * (m_prev - m_new))
                  + jnp.sum(jnp.exp(scale * (x_m - m_new)), axis=1, keepdims=True))
    m_run[...] = m_new

    @pl.when(j == nj - 1)
    def _finalize():
        # cos(theta) at the label, clamped so the angular transform is well defined.
        c = jnp.clip(c_acc[...], -1.0, 1.0)                       # (TB, 1)

        # k = floor(theta*m/pi) = #{ q in 1..m : cos(theta) <= cos(q*pi/m) }.
        k = jnp.zeros_like(c)
        for q in range(1, m + 1):
            k = k + jnp.where(c <= math.cos(q * math.pi / m), 1.0, 0.0)

        # cos(m*theta) = T_m(cos theta), statically-unrolled Chebyshev recurrence.
        if m == 0:
            cos_m_theta = jnp.ones_like(c)
        elif m == 1:
            cos_m_theta = c
        else:
            t_prev, t_cur = jnp.ones_like(c), c
            for _ in range(2, m + 1):
                t_prev, t_cur = t_cur, 2.0 * c * t_cur - t_prev
            cos_m_theta = t_cur

        sign = 1.0 - 2.0 * jnp.mod(k, 2.0)                        # (-1)**k
        psi = sign * cos_m_theta - 2.0 * k                        # (TB, 1)

        # Fold the label term (logit = scale*psi) back into the online softmax state.
        m_prev2 = m_run[...]
        m_fin = jnp.maximum(m_prev2, psi)
        s_fin = (s_run[...] * jnp.exp(scale * (m_prev2 - m_fin))
                 + jnp.exp(scale * (psi - m_fin)))
        s_fin = jnp.maximum(s_fin, 1e-30)                         # pathological-row guard
        per_row = scale * (m_fin - psi) + jnp.log(s_fin)          # lse(fc) - fc[label]

        # Mask rows past the true batch size (partial last row tile).
        row = jax.lax.broadcasted_iota(jnp.int32, per_row.shape, 0) + i * tile_rows
        per_row = jnp.where(row < batch, per_row, 0.0)

        # Lane-dense per-row-tile partial sum (single unmasked (8,128) store).
        partial_ref[...] = jnp.broadcast_to(jnp.sum(per_row), partial_ref.shape)


def _pick_tiles(batch, num_class, max_col_tile=2048):
    """Generation-aware (row_tile, col_tile, vmem_limit) selection."""
    try:
        vmem_bytes = int(pltpu.get_tpu_info().vmem_capacity_bytes)
    except Exception:
        vmem_bytes = 64 * 1024 * 1024                 # conservative (v7x-sized) fallback
    vmem_limit = (vmem_bytes * 3) // 4                # ~96 MiB v5e/v6e, ~48 MiB v7x

    # Column tile: whole row when it fits comfortably, else 128-aligned chunks
    # (online-LSE handles the ragged tail via the col < num_class mask).
    if num_class <= max_col_tile:
        tc = num_class
    else:
        tc = max(128, (max_col_tile // 128) * 128)

    # Budget: ~2x tile (double-buffered input) + ~3x tile (f32 temporaries) in flight,
    # leave the remaining ~1/6 for the padded label block, scratch and output.
    tile_budget = vmem_limit // 6
    tb = tile_budget // max(1, tc * 4)
    tb = max(8, min(1024, (tb // 8) * 8))
    # Guarantee >= 2 row tiles whenever the batch allows it (v7x megacore: 2 TCs busy).
    half = max(8, (((batch + 1) // 2) + 7) // 8 * 8)
    tb = min(tb, half)
    return tb, tc, int(vmem_limit)


def sphere_loss(y_hat, y, *, m, scale, max_col_tile=2048):
    B, C = y_hat.shape
    if y_hat.dtype != jnp.bfloat16:                  # bf16 streams as-is, upcast in-kernel
        y_hat = y_hat.astype(jnp.float32)
    label2d = y.astype(jnp.int32).reshape(B, 1)

    tb, tc, vmem_limit = _pick_tiles(B, C, max_col_tile)
    ni = pl.cdiv(B, tb)
    nj = pl.cdiv(C, tc)

    y_spec = pl.BlockSpec((tb, tc), lambda i, j: (i, j))
    tile_bytes = tb * tc * y_hat.dtype.itemsize
    if ni * nj > 1 and tile_bytes < (1 << 20):
        # Small natural tile (small C): deepen buffering to hide DMA issue latency (v5e).
        y_spec = pl.BlockSpec((tb, tc), lambda i, j: (i, j), pipeline_mode=pl.Buffered(3))

    partials = pl.pallas_call(
        functools.partial(_sphere_loss_kernel,
                          m=int(m), scale=float(scale), batch=B, num_class=C,
                          tile_rows=tb, tile_cols=tc),
        out_shape=jax.ShapeDtypeStruct((ni, 8, 128), jnp.float32),
        grid=(ni, nj),
        in_specs=[y_spec,
                  pl.BlockSpec((tb, 1), lambda i, j: (i, 0))],
        out_specs=pl.BlockSpec((1, 8, 128), lambda i, j: (i, 0, 0)),
        scratch_shapes=[pltpu.VMEM((tb, 1), jnp.float32),   # c_acc (label cosine)
                        pltpu.VMEM((tb, 1), jnp.float32),   # m_run (running max)
                        pltpu.VMEM((tb, 1), jnp.float32)],  # s_run (running sum)
        compiler_params=pltpu.CompilerParams(
            dimension_semantics=("parallel", "arbitrary"),
            vmem_limit_bytes=vmem_limit),
    )(y_hat, label2d)

    return jnp.sum(partials[:, 0, 0]) / B


def sphere_loss_ref(y_hat, y, *, m, scale):
    """Pure-JAX reference mirroring the PyTorch forward (with clamped acos)."""
    B, C = y_hat.shape
    one_hot = jax.nn.one_hot(y, C, dtype=bool)
    cos_t = jnp.clip(jnp.sum(jnp.where(one_hot, y_hat, 0.0), axis=1), -1.0, 1.0)
    theta = jnp.arccos(cos_t)
    k = jnp.floor(theta * m / math.pi)
    psi = jnp.where(jnp.mod(k, 2.0) == 0, 1.0, -1.0) * jnp.cos(m * theta) - 2.0 * k
    fc = jnp.where(one_hot, psi[:, None], y_hat) * scale
    logz = jax.scipy.special.logsumexp(fc, axis=1)
    tgt = jnp.sum(jnp.where(one_hot, fc, 0.0), axis=1)
    return jnp.mean(logz - tgt)


if __name__ == "__main__":
    m, scale = 4, 30.0

    # Test 1: small single-tile case (tb = 8, tc = C = 16).
    B, D, C = 8, 32, 16
    k1, k2, k3 = jax.random.split(jax.random.PRNGKey(0), 3)
    feats = jax.random.normal(k1, (B, D), dtype=jnp.float32)
    w = jax.random.normal(k2, (C, D), dtype=jnp.float32)
    feats = feats / jnp.linalg.norm(feats, axis=1, keepdims=True)
    w = w / jnp.linalg.norm(w, axis=1, keepdims=True)
    y_hat = feats @ w.T                       # cosine similarities in [-1, 1]
    y = jax.random.randint(k3, (B,), 0, C, dtype=jnp.int32)

    loss = jax.block_until_ready(sphere_loss(y_hat, y, m=m, scale=scale))
    ref = jax.block_until_ready(sphere_loss_ref(y_hat, y, m=m, scale=scale))
    assert jnp.allclose(loss, ref, rtol=1e-3, atol=1e-3), (loss, ref)

    # Test 2: exercises row tiling, C-tiled online-LSE with a ragged last column tile,
    # the partial last row tile, and the deeper (Buffered(3)) pipeline for small tiles.
    B2, D2, C2 = 20, 16, 200
    k4, k5, k6 = jax.random.split(jax.random.PRNGKey(1), 3)
    f2 = jax.random.normal(k4, (B2, D2), jnp.float32)
    w2 = jax.random.normal(k5, (C2, D2), jnp.float32)
    f2 = f2 / jnp.linalg.norm(f2, axis=1, keepdims=True)
    w2 = w2 / jnp.linalg.norm(w2, axis=1, keepdims=True)
    yh2 = f2 @ w2.T
    y2 = jax.random.randint(k6, (B2,), 0, C2, dtype=jnp.int32)

    loss2 = jax.block_until_ready(sphere_loss(yh2, y2, m=m, scale=scale, max_col_tile=128))
    ref2 = jax.block_until_ready(sphere_loss_ref(yh2, y2, m=m, scale=scale))
    assert jnp.allclose(loss2, ref2, rtol=1e-3, atol=1e-3), (loss2, ref2)

    print("KERNEL_OK")
</pallas_src>

<mosaic_0001>
module attributes {stable_mosaic.version = 11 : i64} {
  func.func @_sphere_loss_kernel(%arg0: i32, %arg1: i32, %arg2: memref<8x16xf32, #tpu.memory_space<vmem>>, %arg3: memref<8x1xi32, #tpu.memory_space<vmem>>, %arg4: memref<1x8x128xf32, #tpu.memory_space<vmem>>, %arg5: memref<8x1xf32, #tpu.memory_space<vmem>>, %arg6: memref<8x1xf32, #tpu.memory_space<vmem>>, %arg7: memref<8x1xf32, #tpu.memory_space<vmem>>) attributes {dimension_semantics = [#tpu.dimension_semantics<parallel>, #tpu.dimension_semantics<arbitrary>], iteration_bounds = array<i64: 1, 1>, scalar_prefetch = 0 : i64, scratch_operands = 3 : i64, tpu.core_type = #tpu.core_type<tc>, window_params = [{transform_indices = @transform_0, window_bounds = array<i64: 8, 16>}, {transform_indices = @transform_1, window_bounds = array<i64: 8, 1>}, {transform_indices = @transform_2, window_bounds = array<i64: 1, 8, 128>}]} {
    %c0_i32 = arith.constant 0 : i32
    %0 = arith.cmpi eq, %arg1, %c0_i32 : i32
    %1 = arith.extui %0 : i1 to i32
    %c0_i32_0 = arith.constant 0 : i32
    %2 = arith.cmpi ne, %1, %c0_i32_0 : i32
    scf.if %2 {
      %cst_24 = arith.constant 0.000000e+00 : f32
      %43 = vector.broadcast %cst_24 : f32 to vector<8x1xf32>
      %c0_25 = arith.constant 0 : index
      %c0_26 = arith.constant 0 : index
      %44 = vector.load %arg5[%c0_25, %c0_26] : memref<8x1xf32, #tpu.memory_space<vmem>>, vector<8x1xf32>
      tpu.vector_store %arg5[%c0_25, %c0_26], %43 {strides = array<i32>} : memref<8x1xf32, #tpu.memory_space<vmem>>, vector<8x1xf32>,
      %cst_27 = arith.constant -1.000000e+30 : f32
      %45 = vector.broadcast %cst_27 : f32 to vector<8x1xf32>
      %c0_28 = arith.constant 0 : index
      %c0_29 = arith.constant 0 : index
      %46 = vector.load %arg6[%c0_28, %c0_29] : memref<8x1xf32, #tpu.memory_space<vmem>>, vector<8x1xf32>
      tpu.vector_store %arg6[%c0_28, %c0_29], %45 {strides = array<i32>} : memref<8x1xf32, #tpu.memory_space<vmem>>, vector<8x1xf32>,
      %cst_30 = arith.constant 0.000000e+00 : f32
      %47 = vector.broadcast %cst_30 : f32 to vector<8x1xf32>
      %c0_31 = arith.constant 0 : index
      %c0_32 = arith.constant 0 : index
      %48 = vector.load %arg7[%c0_31, %c0_32] : memref<8x1xf32, #tpu.memory_space<vmem>>, vector<8x1xf32>
      tpu.vector_store %arg7[%c0_31, %c0_32], %47 {strides = array<i32>} : memref<8x1xf32, #tpu.memory_space<vmem>>, vector<8x1xf32>,
    } else {
    }
    %c0 = arith.constant 0 : index
    %c0_1 = arith.constant 0 : index
    %3 = vector.load %arg2[%c0, %c0_1] : memref<8x16xf32, #tpu.memory_space<vmem>>, vector<8x16xf32>
    %c0_2 = arith.constant 0 : index
    %c0_3 = arith.constant 0 : index
    %4 = vector.load %arg3[%c0_2, %c0_3] : memref<8x1xi32, #tpu.memory_space<vmem>>, vector<8x1xi32>
    %5 = tpu.iota {dimensions = array<i32: 1>} : vector<8x16xi32>
    %c16_i32 = arith.constant 16 : i32
    %6 = arith.muli %arg1, %c16_i32 : i32
    %7 = vector.broadcast %6 : i32 to vector<8x16xi32>
    %8 = arith.addi %5, %7 : vector<8x16xi32>
    %9 = vector.broadcast %4 : vector<8x1xi32> to vector<8x16xi32>
    %10 = arith.cmpi eq, %8, %9 : vector<8x16xi32>
    %c0_4 = arith.constant 0 : index
    %c0_5 = arith.constant 0 : index
    %11 = vector.load %arg5[%c0_4, %c0_5] : memref<8x1xf32, #tpu.memory_space<vmem>>, vector<8x1xf32>
    %cst = arith.constant 0.000000e+00 : f32
    %12 = vector.broadcast %cst : f32 to vector<8x16xf32>
    %13 = arith.select %10, %3, %12 : vector<8x16xi1>, vector<8x16xf32>
    %cst_6 = arith.constant dense<0.000000e+00> : vector<8xf32>
    %14 = vector.multi_reduction <add>, %13, %cst_6 [1] : vector<8x16xf32> to vector<8xf32>
    %15 = vector.shape_cast %14 : vector<8xf32> to vector<8x1xf32>
    %16 = arith.addf %11, %15 : vector<8x1xf32>
    %c0_7 = arith.constant 0 : index
    %c0_8 = arith.constant 0 : index
    %17 = vector.load %arg5[%c0_7, %c0_8] : memref<8x1xf32, #tpu.memory_space<vmem>>, vector<8x1xf32>
    tpu.vector_store %arg5[%c0_7, %c0_8], %16 {strides = array<i32>} : memref<8x1xf32, #tpu.memory_space<vmem>>, vector<8x1xf32>,
    %cst_9 = arith.constant -1.000000e+30 : f32
    %18 = vector.broadcast %cst_9 : f32 to vector<8x16xf32>
    %19 = arith.select %10, %18, %3 : vector<8x16xi1>, vector<8x16xf32>
    %cst_10 = arith.constant dense<0xFF800000> : vector<8xf32>
    %20 = vector.multi_reduction <maximumf>, %19, %cst_10 [1] : vector<8x16xf32> to vector<8xf32>
    %21 = vector.shape_cast %20 : vector<8xf32> to vector<8x1xf32>
    %c0_11 = arith.constant 0 : index
    %c0_12 = arith.constant 0 : index
    %22 = vector.load %arg6[%c0_11, %c0_12] : memref<8x1xf32, #tpu.memory_space<vmem>>, vector<8x1xf32>
    %23 = arith.maximumf %22, %21 : vector<8x1xf32>
    %c0_13 = arith.constant 0 : index
    %c0_14 = arith.constant 0 : index
    %24 = vector.load %arg7[%c0_13, %c0_14] : memref<8x1xf32, #tpu.memory_space<vmem>>, vector<8x1xf32>
    %25 = arith.subf %22, %23 : vector<8x1xf32>
    %cst_15 = arith.constant 3.000000e+01 : f32
    %26 = vector.broadcast %cst_15 : f32 to vector<8x1xf32>
    %27 = arith.mulf %26, %25 : vector<8x1xf32>
    %28 = math.exp %27 : vector<8x1xf32>
    %29 = arith.mulf %24, %28 : vector<8x1xf32>
    %30 = vector.broadcast %23 : vector<8x1xf32> to vector<8x16xf32>
    %31 = arith.subf %19, %30 : vector<8x16xf32>
    %cst_16 = arith.constant 3.000000e+01 : f32
    %32 = vector.broadcast %cst_16 : f32 to vector<8x16xf32>
    %33 = arith.mulf %32, %31 : vector<8x16xf32>
    %34 = math.exp %33 : vector<8x16xf32>
    %cst_17 = arith.constant dense<0.000000e+00> : vector<8xf32>
    %35 = vector.multi_reduction <add>, %34, %cst_17 [1] : vector<8x16xf32> to vector<8xf32>
    %36 = vector.shape_cast %35 : vector<8xf32> to vector<8x1xf32>
    %37 = arith.addf %29, %36 : vector<8x1xf32>
    %c0_18 = arith.constant 0 : index
    %c0_19 = arith.constant 0 : index
    %38 = vector.load %arg7[%c0_18, %c0_19] : memref<8x1xf32, #tpu.memory_space<vmem>>, vector<8x1xf32>
    tpu.vector_store %arg7[%c0_18, %c0_19], %37 {strides = array<i32>} : memref<8x1xf32, #tpu.memory_space<vmem>>, vector<8x1xf32>,
    %c0_20 = arith.constant 0 : index
    %c0_21 = arith.constant 0 : index
    %39 = vector.load %arg6[%c0_20, %c0_21] : memref<8x1xf32, #tpu.memory_space<vmem>>, vector<8x1xf32>
    tpu.vector_store %arg6[%c0_20, %c0_21], %23 {strides = array<i32>} : memref<8x1xf32, #tpu.memory_space<vmem>>, vector<8x1xf32>,
    %c0_i32_22 = arith.constant 0 : i32
    %40 = arith.cmpi eq, %arg1, %c0_i32_22 : i32
    %41 = arith.extui %40 : i1 to i32
    %c0_i32_23 = arith.constant 0 : i32
    %42 = arith.cmpi ne, %41, %c0_i32_23 : i32
    scf.if %42 {
      %c0_24 = arith.constant 0 : index
      %c0_25 = arith.constant 0 : index
      %43 = vector.load %arg5[%c0_24, %c0_25] : memref<8x1xf32, #tpu.memory_space<vmem>>, vector<8x1xf32>
      %cst_26 = arith.constant -1.000000e+00 : f32
      %cst_27 = arith.constant 1.000000e+00 : f32
      %44 = vector.broadcast %cst_26 : f32 to vector<8x1xf32>
      %45 = arith.maximumf %44, %43 : vector<8x1xf32>
      %46 = vector.broadcast %cst_27 : f32 to vector<8x1xf32>
      %47 = arith.minimumf %46, %45 : vector<8x1xf32>
      %cst_28 = arith.constant 0.000000e+00 : f32
      %48 = vector.broadcast %cst_28 : f32 to vector<8x1xf32>
      %cst_29 = arith.constant 0.707106769 : f32
      %49 = vector.broadcast %cst_29 : f32 to vector<8x1xf32>
      %50 = arith.cmpf ole, %47, %49 : vector<8x1xf32>
      %cst_30 = arith.constant 1.000000e+00 : f32
      %cst_31 = arith.constant 0.000000e+00 : f32
      %51 = vector.broadcast %cst_30 : f32 to vector<8x1xf32>
      %52 = vector.broadcast %cst_31 : f32 to vector<8x1xf32>
      %53 = arith.select %50, %51, %52 : vector<8x1xi1>, vector<8x1xf32>
      %54 = arith.addf %48, %53 : vector<8x1xf32>
      %cst_32 = arith.constant 6.12323426E-17 : f32
      %55 = vector.broadcast %cst_32 : f32 to vector<8x1xf32>
      %56 = arith.cmpf ole, %47, %55 : vector<8x1xf32>
      %cst_33 = arith.constant 1.000000e+00 : f32
      %cst_34 = arith.constant 0.000000e+00 : f32
      %57 = vector.broadcast %cst_33 : f32 to vector<8x1xf32>
      %58 = vector.broadcast %cst_34 : f32 to vector<8x1xf32>
      %59 = arith.select %56, %57, %58 : vector<8x1xi1>, vector<8x1xf32>
      %60 = arith.addf %54, %59 : vector<8x1xf32>
      %cst_35 = arith.constant -0.707106769 : f32
      %61 = vector.broadcast %cst_35 : f32 to vector<8x1xf32>
      %62 = arith.cmpf ole, %47, %61 : vector<8x1xf32>
      %cst_36 = arith.constant 1.000000e+00 : f32
      %cst_37 = arith.constant 0.000000e+00 : f32
      %63 = vector.broadcast %cst_36 : f32 to vector<8x1xf32>
      %64 = vector.broadcast %cst_37 : f32 to vector<8x1xf32>
      %65 = arith.select %62, %63, %64 : vector<8x1xi1>, vector<8x1xf32>
      %66 = arith.addf %60, %65 : vector<8x1xf32>
      %cst_38 = arith.constant -1.000000e+00 : f32
      %67 = vector.broadcast %cst_38 : f32 to vector<8x1xf32>
      %68 = arith.cmpf ole, %47, %67 : vector<8x1xf32>
      %cst_39 = arith.constant 1.000000e+00 : f32
      %cst_40 = arith.constant 0.000000e+00 : f32
      %69 = vector.broadcast %cst_39 : f32 to vector<8x1xf32>
      %70 = vector.broadcast %cst_40 : f32 to vector<8x1xf32>
      %71 = arith.select %68, %69, %70 : vector<8x1xi1>, vector<8x1xf32>
      %72 = arith.addf %66, %71 : vector<8x1xf32>
      %cst_41 = arith.constant 1.000000e+00 : f32
      %73 = vector.broadcast %cst_41 : f32 to vector<8x1xf32>
      %cst_42 = arith.constant 2.000000e+00 : f32
      %74 = vector.broadcast %cst_42 : f32 to vector<8x1xf32>
      %75 = arith.mulf %74, %47 : vector<8x1xf32>
      %76 = arith.mulf %75, %47 : vector<8x1xf32>
      %77 = arith.subf %76, %73 : vector<8x1xf32>
      %cst_43 = arith.constant 2.000000e+00 : f32
      %78 = vector.broadcast %cst_43 : f32 to vector<8x1xf32>
      %79 = arith.mulf %78, %47 : vector<8x1xf32>
      %80 = arith.mulf %79, %77 : vector<8x1xf32>
      %81 = arith.subf %80, %47 : vector<8x1xf32>
      %cst_44 = arith.constant 2.000000e+00 : f32
      %82 = vector.broadcast %cst_44 : f32 to vector<8x1xf32>
      %83 = arith.mulf %82, %47 : vector<8x1xf32>
      %84 = arith.mulf %83, %81 : vector<8x1xf32>
      %85 = arith.subf %84, %77 : vector<8x1xf32>
      %cst_45 = arith.constant 2.000000e+00 : f32
      %86 = vector.broadcast %cst_45 : f32 to vector<8x1xf32>
      %87 = arith.remf %72, %86 : vector<8x1xf32>
      %cst_46 = arith.constant 0.000000e+00 : f32
      %88 = vector.broadcast %cst_46 : f32 to vector<8x1xf32>
      %89 = arith.cmpf one, %87, %88 : vector<8x1xf32>
      %cst_47 = arith.constant 0.000000e+00 : f32
      %90 = vector.broadcast %cst_47 : f32 to vector<8x1xf32>
      %91 = arith.cmpf olt, %87, %90 : vector<8x1xf32>
      %cst_48 = arith.constant 0.000000e+00 : f32
      %92 = arith.cmpf olt, %cst_45, %cst_48 : f32
      %93 = vector.broadcast %92 : i1 to vector<8x1xi1>
      %94 = vector.broadcast %93 : vector<8x1xi1> to vector<8x1xi1>
      %95 = arith.xori %91, %94 : vector<8x1xi1>
      %96 = arith.andi %95, %89 : vector<8x1xi1>
      %97 = vector.broadcast %cst_45 : f32 to vector<8x1xf32>
      %98 = arith.addf %87, %97 : vector<8x1xf32>
      %99 = arith.select %96, %98, %87 : vector<8x1xi1>, vector<8x1xf32>
      %cst_49 = arith.constant 2.000000e+00 : f32
      %100 = vector.broadcast %cst_49 : f32 to vector<8x1xf32>
      %101 = arith.mulf %100, %99 : vector<8x1xf32>
      %cst_50 = arith.constant 1.000000e+00 : f32
      %102 = vector.broadcast %cst_50 : f32 to vector<8x1xf32>
      %103 = arith.subf %102, %101 : vector<8x1xf32>
      %104 = arith.mulf %103, %85 : vector<8x1xf32>
      %cst_51 = arith.constant 2.000000e+00 : f32
      %105 = vector.broadcast %cst_51 : f32 to vector<8x1xf32>
      %106 = arith.mulf %105, %72 : vector<8x1xf32>
      %107 = arith.subf %104, %106 : vector<8x1xf32>
      %c0_52 = arith.constant 0 : index
      %c0_53 = arith.constant 0 : index
      %108 = vector.load %arg6[%c0_52, %c0_53] : memref<8x1xf32, #tpu.memory_space<vmem>>, vector<8x1xf32>
      %109 = arith.maximumf %108, %107 : vector<8x1xf32>
      %c0_54 = arith.constant 0 : index
      %c0_55 = arith.constant 0 : index
      %110 = vector.load %arg7[%c0_54, %c0_55] : memref<8x1xf32, #tpu.memory_space<vmem>>, vector<8x1xf32>
      %111 = arith.subf %108, %109 : vector<8x1xf32>
      %cst_56 = arith.constant 3.000000e+01 : f32
      %112 = vector.broadcast %cst_56 : f32 to vector<8x1xf32>
      %113 = arith.mulf %112, %111 : vector<8x1xf32>
      %114 = math.exp %113 : vector<8x1xf32>
      %115 = arith.mulf %110, %114 : vector<8x1xf32>
      %116 = arith.subf %107, %109 : vector<8x1xf32>
      %cst_57 = arith.constant 3.000000e+01 : f32
      %117 = vector.broadcast %cst_57 : f32 to vector<8x1xf32>
      %118 = arith.mulf %117, %116 : vector<8x1xf32>
      %119 = math.exp %118 : vector<8x1xf32>
      %120 = arith.addf %115, %119 : vector<8x1xf32>
      %cst_58 = arith.constant 1.000000e-30 : f32
      %121 = vector.broadcast %cst_58 : f32 to vector<8x1xf32>
      %122 = arith.maximumf %120, %121 : vector<8x1xf32>
      %123 = arith.subf %109, %107 : vector<8x1xf32>
      %cst_59 = arith.constant 3.000000e+01 : f32
      %124 = vector.broadcast %cst_59 : f32 to vector<8x1xf32>
      %125 = arith.mulf %124, %123 : vector<8x1xf32>
      %126 = math.log %122 : vector<8x1xf32>
      %127 = arith.addf %125, %126 : vector<8x1xf32>
      %128 = tpu.iota {dimensions = array<i32: 0>} : vector<8x1xi32>
      %c8_i32 = arith.constant 8 : i32
      %129 = arith.muli %arg0, %c8_i32 : i32
      %130 = vector.broadcast %129 : i32 to vector<8x1xi32>
      %131 = arith.addi %128, %130 : vector<8x1xi32>
      %c8_i32_60 = arith.constant 8 : i32
      %132 = vector.broadcast %c8_i32_60 : i32 to vector<8x1xi32>
      %133 = arith.cmpi slt, %131, %132 : vector<8x1xi32>
      %cst_61 = arith.constant 0.000000e+00 : f32
      %134 = vector.broadcast %cst_61 : f32 to vector<8x1xf32>
      %135 = arith.select %133, %127, %134 : vector<8x1xi1>, vector<8x1xf32>
      %136 = vector.shape_cast %135 : vector<8x1xf32> to vector<1x8x1xf32>
      %cst_62 = arith.constant dense<0.000000e+00> : vector<1xf32>
      %137 = vector.multi_reduction <add>, %136, %cst_62 [1, 2] : vector<1x8x1xf32> to vector<1xf32>
      %138 = vector.shape_cast %137 : vector<1xf32> to vector<1x1x1xf32>
      %139 = vector.extract %138[0, 0, 0] : f32 from vector<1x1x1xf32>
      %140 = vector.broadcast %139 : f32 to vector<1x8x128xf32>
      %c0_63 = arith.constant 0 : index
      %c0_64 = arith.constant 0 : index
      %c0_65 = arith.constant 0 : index
      %141 = vector.load %arg4[%c0_63, %c0_64, %c0_65] : memref<1x8x128xf32, #tpu.memory_space<vmem>>, vector<1x8x128xf32>
      tpu.vector_store %arg4[%c0_63, %c0_64, %c0_65], %140 {strides = array<i32>} : memref<1x8x128xf32, #tpu.memory_space<vmem>>, vector<1x8x128xf32>,
    } else {
    }
    return
  }
  func.func @transform_0(%arg0: i32, %arg1: i32) -> (i32, i32) {
    %c0_i32 = arith.constant 0 : i32
    return %arg0, %arg1 : i32, i32
  }
  func.func @transform_1(%arg0: i32, %arg1: i32) -> (i32, i32) {
    %c0_i32 = arith.constant 0 : i32
    %c0_i32_0 = arith.constant 0 : i32
    return %arg0, %c0_i32 : i32, i32
  }
  func.func @transform_2(%arg0: i32, %arg1: i32) -> (i32, i32, i32) {
    %c0_i32 = arith.constant 0 : i32
    %c0_i32_0 = arith.constant 0 : i32
    %c0_i32_1 = arith.constant 0 : i32
    return %arg0, %c0_i32, %c0_i32_0 : i32, i32, i32
  }
}

</mosaic_0001>

<llo_original>
// kernel: tpu_custom_call.1
$region0: #{tpu_custom_call.1}
  #allocation0 [shape = 'u32[]', space=smem, size = 0x4, offset = 0x4, fixed_abs, tag = 'smem constant byte address 0x4 - core index']
  #allocation1 [shape = 'u32[144,128]{1,0:T(1,128)}', space=vmem, size = 0x12000, scoped, tag = 'internal scratch']
  #allocation2 [shape = 'f32[8,1]{1,0:T(8,128)}', space=vmem, size = 0x1000, scoped, tag = 'scratch operand']
  #allocation3 [shape = 'f32[8,1]{1,0:T(8,128)}', space=vmem, size = 0x1000, scoped, tag = 'scratch operand']
  #allocation4 [shape = 'f32[8,1]{1,0:T(8,128)}', space=vmem, size = 0x1000, scoped, tag = 'scratch operand']
  %s0 = inlined_call_operand.vmem [shape: f32[8,16], index: 0, kind: input, shape index: {}]
  %s1 = inlined_call_operand.vmem [shape: s32[8,1], index: 1, kind: input, shape index: {}]
  %s2 = inlined_call_operand.hbm [shape: f32[1,8,128], index: 2, kind: output, shape index: {}]
  %s3 = sld [smem:[#allocation0]]
  $region26: #{tpu_custom_call.1} parent=0
    _
  %s5 = ssub.s32 1, %s3
  %s6 = scalar_select 0, %s5, %s3
  $region1: #{tpu_custom_call.1} parent=0
    #allocation5 [shape = 'u8[4096]{0}', space=vmem, size = 0x1000, scoped, tag = 'output window, operand 0, single buffered']
    #allocation6 [shape = 's32[1]{0}', space=sflag, size = 0x4, scoped, tag = 'scoped memory for tpu_custom_call.1']
    %7 = vsyncpa [#allocation6], 0
    // Predicated region
    $region2: #{tpu_custom_call.1} parent=1 // pred_check
      _
    $region3: #{tpu_custom_call.1} parent=1 // pred_check_branch
      %9 = sbr.rel (0) target = $region5
    $region4: #{tpu_custom_call.1} parent=1 // pred_region
      _
    $region5: #{tpu_custom_call.1} parent=1 // pred_fallthru
      _
    // Predicated region
    $region6: #{tpu_custom_call.1} parent=1 // pred_check
      _
    $region7: #{tpu_custom_call.1} parent=1 // pred_check_branch
      %11 = sbr.rel (0) target = $region9
    $region8: #{tpu_custom_call.1} parent=1 // pred_region
      _
    $region9: #{tpu_custom_call.1} parent=1 // pred_fallthru
      _
    %p12 = scmp.eq.s32.totalorder 0, 0
    // Predicated region
    $region10: #{tpu_custom_call.1} parent=1 // pred_check
      %p13 = pneg %p12
    $region11: #{tpu_custom_call.1} parent=1 // pred_check_branch
      %15 = sbr.rel (%p13) target = $region13
    $region12: #{tpu_custom_call.1} parent=1 // pred_region
      %vm16 = vcmask 7168
      %17 = vst.msk [vmem:[#allocation2] sm:$0xff] %vm16, 0.0
      %18 = vst.msk [vmem:[#allocation3] sm:$0xff] %vm16, -1e+30
      %19 = vst.msk [vmem:[#allocation4] sm:$0xff] %vm16, 0.0
    $region13: #{tpu_custom_call.1} parent=1 // pred_fallthru
      _
    %v20 = vld [vmem:[%s0] sm:$0xff]
    %v21 = vld [vmem:[%s1] sm:$0xff]
    %v22 = vlaneseq
    %v23 = vand.u32 %v22, 127
    %s24 = smul.u32 0, 16
    %v25 = vstv %s24
    %v26 = vadd.s32 %v23, %v25
    %27 = vset.pattern.permute.xlu0 0
    %28 = vperm.xlu0 %27, %v21
    %v29 = vpop.permute.xlu0 %28
    %vm30 = vcmp.eq.s32.totalorder %v26, %v29
    %v31 = vld [vmem:[#allocation2] sm:$0xff]
    %v32 = vsel %vm30, %v20, 0.0
    %vm33 = vcmask 130048
    %v34 = vsel %vm33, %v32, 0.0
    %35 = vadd.xlane.f32.xlu0 %v34
    %v36 = vpop.xlane.xlu0 %35
    %v37 = vadd.f32 %v31, %v36
    %vm38 = vcmask 7168
    %39 = vst.msk [vmem:[#allocation2] sm:$0xff] %vm38, %v37
    %v40 = vsel %vm30, -1e+30, %v20
    %v41 = vsel %vm33, %v40, -inf
    %42 = vmax.xlane.f32.xlu0 %v41
    %v43 = vpop.xlane.xlu0 %42
    %v44 = vld [vmem:[#allocation3] sm:$0xff]
    %v45 = vmax.f32 %v44, %v43
    %v46 = vld [vmem:[#allocation4] sm:$0xff]
    %v47 = vsub.f32 %v44, %v45
    %v48 = vmul.f32 %v47, 30.0
    %v49 = vmul.f32 %v48, 1.442695
    %v50 = vpow.pop %v49
    %v51 = vmul.f32 %v46, %v50
    %53 = vset.pattern.permute.xlu0 0
    %54 = vperm.xlu0 %53, %v45
    %v55 = vpop.permute.xlu0 %54
    %v57 = vsub.f32 %v40, %v55
    %v58 = vmul.f32 %v57, 30.0
    %v59 = vmul.f32 %v58, 1.442695
    %v60 = vpow.pop %v59
    %v61 = vsel %vm33, %v60, 0.0
    %62 = vadd.xlane.f32.xlu0 %v61
    %v63 = vpop.xlane.xlu0 %62
    %v64 = vadd.f32 %v51, %v63
    %65 = vst.msk [vmem:[#allocation4] sm:$0xff] %vm38, %v64
    %66 = vst.msk [vmem:[#allocation3] sm:$0xff] %vm38, %v45
    // Predicated region
    $region14: #{tpu_custom_call.1} parent=1 // pred_check
      %p67 = pneg %p12
    $region15: #{tpu_custom_call.1} parent=1 // pred_check_branch
      %69 = sbr.rel (%p67) target = $region17
    $region16: #{tpu_custom_call.1} parent=1 // pred_region
      %v70 = vld [vmem:[#allocation2] sm:$0xff]
      %v71 = vmax.f32 %v70, -1.0
      %v72 = vmin.f32 %v71, 1.0
      %vm73 = vcmp.le.f32.partialorder %v72, 0.70710677
      %v74 = vsel %vm73, 1.0, 0.0
      %v75 = vadd.f32 %v74, 0.0
      %vm76 = vcmp.le.f32.partialorder %v72, 6.123234e-17
      %v77 = vsel %vm76, 1.0, 0.0
      %v78 = vadd.f32 %v75, %v77
      %vm79 = vcmp.le.f32.partialorder %v72, -0.70710677
      %v80 = vsel %vm79, 1.0, 0.0
      %v81 = vadd.f32 %v78, %v80
      %vm82 = vcmp.le.f32.partialorder %v72, -1.0
      %v83 = vsel %vm82, 1.0, 0.0
      %v84 = vadd.f32 %v81, %v83
      %v85 = vmul.f32 %v72, 2.0
      %v86 = vmul.f32 %v85, %v72
      %v87 = vsub.f32 %v86, 1.0
      %v88 = vmul.f32 %v85, %v87
      %v89 = vsub.f32 %v88, %v72
      %v90 = vmul.f32 %v85, %v89
      %v91 = vsub.f32 %v90, %v87
      %v92 = vand.u32 2147483647, %v84
      %v93 = vrcp.pop 2.0
      %v94 = vmul.f32 %v92, %v93
      %v95 = vfloor.f32 %v94
      %v96 = vmul.f32 %v95, 2.0
      %v97 = vsub.f32 %v92, %v96
      %vm98 = vcmp.eq.f32.partialorder %v97, 2.0
      %v99 = vsel %vm98, 0.0, %v97
      %v100 = vand.u32 2147483647, %v99
      %v101 = vand.u32 %v84, 2147483648
      %v102 = vor.u32 %v100, %v101
      %vm103 = vcmp.ne.f32.partialorder %v102, 0.0
      %vm104 = vcmp.lt.f32.partialorder %v102, 0.0
      %vm105 = vmand %vm104, %vm103
      %v106 = vadd.f32 %v102, 2.0
      %v107 = vsel %vm105, %v106, %v102
      %v108 = vmul.f32 %v107, 2.0
      %v109 = vsub.f32 1.0, %v108
      %v110 = vmul.f32 %v109, %v91
      %v111 = vmul.f32 %v84, 2.0
      %v112 = vsub.f32 %v110, %v111
      %v113 = vld [vmem:[#allocation3] sm:$0xff]
      %v114 = vmax.f32 %v113, %v112
      %v115 = vld [vmem:[#allocation4] sm:$0xff]
      %v116 = vsub.f32 %v113, %v114
      %v117 = vmul.f32 %v116, 30.0
      %v118 = vmul.f32 %v117, 1.442695
      %v119 = vpow.pop %v118
      %v120 = vmul.f32 %v115, %v119
      %v121 = vsub.f32 %v112, %v114
      %v122 = vmul.f32 %v121, 30.0
      %v123 = vmul.f32 %v122, 1.442695
      %v124 = vpow.pop %v123
      %v125 = vadd.f32 %v120, %v124
      %v126 = vmax.f32 %v125, 1e-30
      %v127 = vsub.f32 %v114, %v112
      %v128 = vmul.f32 %v127, 30.0
      %v129 = vlog2.pop %v126
      %v130 = vmul.f32 %v129, 0.6931472
      %v131 = vadd.f32 %v128, %v130
      %v132 = vlaneseq
      %v133 = vshrl.u32 %v132, 7
      %s134 = smul.u32 0, 8
      %v135 = vstv %s134
      %v136 = vadd.s32 %v133, %v135
      %vm137 = vcmp.lt.s32.totalorder %v136, 8
      %v138 = vsel %vm137, %v131, 0.0
      %v139 = vsel %vm38, %v138, 0.0
      %140 = vadd.xlane.f32.xlu0 %v139
      %v141 = vpop.xlane.xlu0 %140
      %v142 = vrot.slane %v141, 4
      %v143 = vadd.f32 %v141, %v142
      %v144 = vrot.slane %v143, 2
      %v145 = vadd.f32 %v143, %v144
      %v146 = vrot.slane %v145, 1
      %v147 = vadd.f32 %v145, %v146
      %s148 = vtos %v147
      %v149 = vstv %s148
      %150 = vst [vmem:[#allocation5] sm:$0xff] %v149
    $region17: #{tpu_custom_call.1} parent=1 // pred_fallthru
      _
    // Predicated region
    $region18: #{tpu_custom_call.1} parent=1 // pred_check
      _
    $region19: #{tpu_custom_call.1} parent=1 // pred_check_branch
      %152 = sbr.rel (0) target = $region21
    $region20: #{tpu_custom_call.1} parent=1 // pred_region
      %s154 = ssub.s32 128, 128
      %155 = vsyncadd [#allocation6], %s154
      %s157 = sshll.u32 [#allocation5], 4
      %s158 = int_to_ptr.vmem [resolvable:$true] %s157
      %160 = dma.vmem_to_hbm [thread:$0]  %s158, 128, %s2, [#allocation6]
    $region21: #{tpu_custom_call.1} parent=1 // pred_fallthru
      _
    // Predicated region
    $region22: #{tpu_custom_call.1} parent=1 // pred_check
      _
    $region23: #{tpu_custom_call.1} parent=1 // pred_check_branch
      %162 = sbr.rel (0) target = $region25
    $region24: #{tpu_custom_call.1} parent=1 // pred_region
      %163 = dma.done [#allocation6], 128
    $region25: #{tpu_custom_call.1} parent=1 // pred_fallthru
      _
    %164 = vsyncpa [#allocation6], 1

</llo_original>
